<compile_context>
chip_gen: v6e
topology: v6e:2x2x1
jax: 0.10.0
libtpu: 0.0.40
codegen_flags: <defaults>
</compile_context>

<pallas_src>
import functools

import numpy as np
import jax
import jax.numpy as jnp
from jax.experimental import pallas as pl
from jax.experimental.pallas import tpu as pltpu


def _fusion_kernel(n_feat, w_ref, x_ref, *refs):
    """out = x * w[0] + sum_i align(feat_i) * w[i+1].

    w_ref: (n_feat+1,) f32 in SMEM.
    x_ref / feature refs / out_ref: VMEM tiles of shape (C_i, TS) (batch dim squeezed).
    Channel alignment against cx = out_ref.shape[0]:
      C_i == cx : plain add
      C_i >  cx : use only the first cx channels of the tile
      C_i <  cx : add only into the first C_i channels of the output tile
    """
    in_refs = refs[:n_feat]
    out_ref = refs[n_feat]
    cx = out_ref.shape[0]

    acc = x_ref[...].astype(jnp.float32) * w_ref[0]
    narrow = []  # (channels, weighted value) for features with fewer channels than x
    for i, r in enumerate(in_refs):
        ci = r.shape[0]
        wi = w_ref[i + 1]
        if ci == cx:
            acc = acc + r[...].astype(jnp.float32) * wi
        elif ci > cx:
            acc = acc + r[:cx, :].astype(jnp.float32) * wi
        else:
            narrow.append((ci, r[...].astype(jnp.float32) * wi))

    out_ref[...] = acc.astype(out_ref.dtype)
    # Features narrower than x only touch the first `ci` channels of the output tile.
    for ci, v in narrow:
        out_ref[:ci, :] = (out_ref[:ci, :].astype(jnp.float32) + v).astype(out_ref.dtype)


def weighted_feature_fusion(x, outputs, layers, w_raw=None):
    """JAX/Pallas equivalent of WeightedFeatureFusion.forward.

    Args:
      x:       (N, Cx, H, W) feature map (NCHW).
      outputs: list of (N, Ci, H, W) feature maps.
      layers:  indices into `outputs` to fuse with x.
      w_raw:   optional (len(layers)+1,) raw fusion weights (the nn.Parameter);
               None behaves like weight=False (plain additive fusion).
    """
    n = len(layers) + 1
    N, cx, H, W = x.shape
    hw = H * W
    out_dtype = x.dtype
    itemsize = jnp.dtype(out_dtype).itemsize
    # sublane multiple for this dtype (8 for f32, 16 for bf16, 32 for int8/fp8)
    sublane = 8 * 4 // itemsize

    # Fusion weights (sigmoid * 2/n); weight=False <=> all-ones scaling.
    if w_raw is not None:
        w = jax.nn.sigmoid(w_raw.astype(jnp.float32)) * (2.0 / n)
    else:
        w = jnp.ones((n,), dtype=jnp.float32)

    # Free reshapes only (no pads, no casts): NCHW -> (N, C, H*W).
    x3 = x.reshape(N, cx, hw)
    feats, load_chans = [], []
    for li in layers:
        o = outputs[li]
        co = o.shape[1]
        feats.append(o.reshape(N, co, hw))
        if co > cx and cx % sublane == 0:
            load_chans.append(cx)   # DMA only the channels we actually use
        else:
            load_chans.append(co)   # DMA full channel dim; align inside the kernel

    # Spatial tile: the largest lane-dense tile whose double-buffered working set
    # (x + all fused features + output) fits a budget safe on v5e/v6e/v7x.
    vmem_budget = 16 * 1024 * 1024
    chan_total = 2 * cx + sum(load_chans)                   # x + output + features
    max_ts = vmem_budget // (2 * chan_total * itemsize)     # 2x: double buffering
    if max_ts >= hw:
        ts = hw                                             # one full-width block
    else:
        ts = max(128, (max_ts // 128) * 128)                # lane-dense multiple of 128
    s_blocks = pl.cdiv(hw, ts)
    grid = (N, s_blocks)

    def idx(nb, sb):
        return (nb, 0, sb)

    in_specs = (
        [pl.BlockSpec(memory_space=pltpu.MemorySpace.SMEM)]          # fusion weights
        + [pl.BlockSpec((None, cx, ts), idx)]                        # x
        + [pl.BlockSpec((None, c, ts), idx) for c in load_chans]     # fused features
    )
    out_spec = pl.BlockSpec((None, cx, ts), idx)

    out3 = pl.pallas_call(
        functools.partial(_fusion_kernel, len(feats)),
        out_shape=jax.ShapeDtypeStruct((N, cx, hw), out_dtype),
        grid=grid,
        in_specs=in_specs,
        out_specs=out_spec,
        compiler_params=pltpu.CompilerParams(
            dimension_semantics=("parallel", "parallel"),
            vmem_limit_bytes=32 * 1024 * 1024),
    )(w, x3, *feats)

    return out3.reshape(N, cx, H, W)


def _reference(x, outputs, layers, w_raw):
    """Pure-JAX reference mirroring the PyTorch forward (with the evident intent
    of the cx<co / cx>co branches)."""
    n = len(layers) + 1
    if w_raw is not None:
        w = jax.nn.sigmoid(w_raw.astype(jnp.float32)) * (2.0 / n)
    else:
        w = jnp.ones((n,), jnp.float32)
    acc = x.astype(jnp.float32) * w[0]
    cx = x.shape[1]
    for i in range(n - 1):
        o = outputs[layers[i]].astype(jnp.float32) * w[i + 1]
        co = o.shape[1]
        if cx == co:
            acc = acc + o
        elif cx < co:
            acc = acc + o[:, :cx]
        else:
            acc = acc.at[:, :co].add(o)
    return acc.astype(x.dtype)


if __name__ == "__main__":
    key = jax.random.PRNGKey(0)
    k1, k2, k3 = jax.random.split(key, 3)

    N, C, H, W = 2, 4, 16, 16
    x = jax.random.normal(k1, (N, C, H, W), dtype=jnp.float32)
    outputs = [
        jax.random.normal(k2, (N, 6, H, W), dtype=jnp.float32),  # co > cx branch
        jax.random.normal(k3, (N, 3, H, W), dtype=jnp.float32),  # co < cx branch
    ]
    layers = [0, 1]
    # nn.Parameter(torch.zeros(n)) -> deterministic zeros (sigmoid(0)*2/n = 1/n each).
    w_raw = jnp.zeros((len(layers) + 1,), dtype=jnp.float32)

    y = weighted_feature_fusion(x, outputs, layers, w_raw=w_raw)
    y = jax.block_until_ready(y)

    y_ref = _reference(x, outputs, layers, w_raw)
    np.testing.assert_allclose(np.asarray(y), np.asarray(y_ref), rtol=1e-5, atol=1e-5)

    print("KERNEL_OK")
</pallas_src>

<mosaic_0001>
module attributes {stable_mosaic.version = 11 : i64} {
  func.func @_fusion_kernel(%arg0: i32, %arg1: i32, %arg2: memref<3xf32, #tpu.memory_space<smem>>, %arg3: memref<1x4x256xf32, #tpu.memory_space<vmem>>, %arg4: memref<1x6x256xf32, #tpu.memory_space<vmem>>, %arg5: memref<1x3x256xf32, #tpu.memory_space<vmem>>, %arg6: memref<1x4x256xf32, #tpu.memory_space<vmem>>) attributes {dimension_semantics = [#tpu.dimension_semantics<parallel>, #tpu.dimension_semantics<parallel>], iteration_bounds = array<i64: 2, 1>, scalar_prefetch = 0 : i64, scratch_operands = 0 : i64, tpu.core_type = #tpu.core_type<tc>, window_params = [{transform_indices = @transform_0, window_bounds = array<i64: 3>}, {transform_indices = @transform_1, window_bounds = array<i64: 1, 4, 256>}, {transform_indices = @transform_2, window_bounds = array<i64: 1, 6, 256>}, {transform_indices = @transform_3, window_bounds = array<i64: 1, 3, 256>}, {transform_indices = @transform_4, window_bounds = array<i64: 1, 4, 256>}]} {
    %c0 = arith.constant 0 : index
    %c0_0 = arith.constant 0 : index
    %c0_1 = arith.constant 0 : index
    %0 = vector.load %arg3[%c0, %c0_0, %c0_1] : memref<1x4x256xf32, #tpu.memory_space<vmem>>, vector<1x4x256xf32>
    %1 = vector.shape_cast %0 : vector<1x4x256xf32> to vector<4x256xf32>
    %c0_2 = arith.constant 0 : index
    %2 = memref.load %arg2[%c0_2] : memref<3xf32, #tpu.memory_space<smem>>
    %3 = vector.broadcast %2 : f32 to vector<4x256xf32>
    %4 = arith.mulf %1, %3 : vector<4x256xf32>
    %c1 = arith.constant 1 : index
    %5 = memref.load %arg2[%c1] : memref<3xf32, #tpu.memory_space<smem>>
    %c0_3 = arith.constant 0 : index
    %c0_4 = arith.constant 0 : index
    %c0_5 = arith.constant 0 : index
    %6 = vector.load %arg4[%c0_3, %c0_4, %c0_5] : memref<1x6x256xf32, #tpu.memory_space<vmem>>, vector<1x4x256xf32>
    %7 = vector.shape_cast %6 : vector<1x4x256xf32> to vector<4x256xf32>
    %8 = vector.broadcast %5 : f32 to vector<4x256xf32>
    %9 = arith.mulf %7, %8 : vector<4x256xf32>
    %10 = arith.addf %4, %9 : vector<4x256xf32>
    %c2 = arith.constant 2 : index
    %11 = memref.load %arg2[%c2] : memref<3xf32, #tpu.memory_space<smem>>
    %c0_6 = arith.constant 0 : index
    %c0_7 = arith.constant 0 : index
    %c0_8 = arith.constant 0 : index
    %12 = vector.load %arg5[%c0_6, %c0_7, %c0_8] : memref<1x3x256xf32, #tpu.memory_space<vmem>>, vector<1x3x256xf32>
    %13 = vector.shape_cast %12 : vector<1x3x256xf32> to vector<3x256xf32>
    %14 = vector.broadcast %11 : f32 to vector<3x256xf32>
    %15 = arith.mulf %13, %14 : vector<3x256xf32>
    %c0_9 = arith.constant 0 : index
    %c0_10 = arith.constant 0 : index
    %c0_11 = arith.constant 0 : index
    %16 = vector.load %arg6[%c0_9, %c0_10, %c0_11] : memref<1x4x256xf32, #tpu.memory_space<vmem>>, vector<1x4x256xf32>
    %17 = vector.shape_cast %16 : vector<1x4x256xf32> to vector<4x256xf32>
    %18 = vector.shape_cast %10 : vector<4x256xf32> to vector<1x4x256xf32>
    tpu.vector_store %arg6[%c0_9, %c0_10, %c0_11], %18 {strides = array<i32>} : memref<1x4x256xf32, #tpu.memory_space<vmem>>, vector<1x4x256xf32>,
    %c0_12 = arith.constant 0 : index
    %c0_13 = arith.constant 0 : index
    %c0_14 = arith.constant 0 : index
    %19 = vector.load %arg6[%c0_12, %c0_13, %c0_14] : memref<1x4x256xf32, #tpu.memory_space<vmem>>, vector<1x3x256xf32>
    %20 = vector.shape_cast %19 : vector<1x3x256xf32> to vector<3x256xf32>
    %21 = arith.addf %20, %15 : vector<3x256xf32>
    %c0_15 = arith.constant 0 : index
    %c0_16 = arith.constant 0 : index
    %c0_17 = arith.constant 0 : index
    %22 = vector.load %arg6[%c0_15, %c0_16, %c0_17] : memref<1x4x256xf32, #tpu.memory_space<vmem>>, vector<1x3x256xf32>
    %23 = vector.shape_cast %22 : vector<1x3x256xf32> to vector<3x256xf32>
    %24 = vector.shape_cast %21 : vector<3x256xf32> to vector<1x3x256xf32>
    tpu.vector_store %arg6[%c0_15, %c0_16, %c0_17], %24 {strides = array<i32>} : memref<1x4x256xf32, #tpu.memory_space<vmem>>, vector<1x3x256xf32>,
    return
  }
  func.func @transform_0(%arg0: i32, %arg1: i32) -> i32 {
    %c0_i32 = arith.constant 0 : i32
    %c0_i32_0 = arith.constant 0 : i32
    return %c0_i32 : i32
  }
  func.func @transform_1(%arg0: i32, %arg1: i32) -> (i32, i32, i32) {
    %c0_i32 = arith.constant 0 : i32
    %c0_i32_0 = arith.constant 0 : i32
    return %arg0, %c0_i32, %arg1 : i32, i32, i32
  }
  func.func @transform_2(%arg0: i32, %arg1: i32) -> (i32, i32, i32) {
    %c0_i32 = arith.constant 0 : i32
    %c0_i32_0 = arith.constant 0 : i32
    return %arg0, %c0_i32, %arg1 : i32, i32, i32
  }
  func.func @transform_3(%arg0: i32, %arg1: i32) -> (i32, i32, i32) {
    %c0_i32 = arith.constant 0 : i32
    %c0_i32_0 = arith.constant 0 : i32
    return %arg0, %c0_i32, %arg1 : i32, i32, i32
  }
  func.func @transform_4(%arg0: i32, %arg1: i32) -> (i32, i32, i32) {
    %c0_i32 = arith.constant 0 : i32
    %c0_i32_0 = arith.constant 0 : i32
    return %arg0, %c0_i32, %arg1 : i32, i32, i32
  }
}

</mosaic_0001>

<llo_original>
// kernel: tpu_custom_call.1
$region0: #{tpu_custom_call.1}
  #allocation0 [shape = 'u32[]', space=smem, size = 0x4, offset = 0x4, fixed_abs, tag = 'smem constant byte address 0x4 - core index']
  #allocation1 [shape = 'u32[144,128]{1,0:T(1,128)}', space=vmem, size = 0x12000, scoped, tag = 'internal scratch']
  %s0 = inlined_call_operand.vmem [shape: f32[3], index: 0, kind: input, shape index: {}]
  %s1 = inlined_call_operand.vmem [shape: f32[2,4,256], index: 1, kind: input, shape index: {}]
  %s2 = inlined_call_operand.vmem [shape: f32[2,6,256], index: 2, kind: input, shape index: {}]
  %s3 = inlined_call_operand.vmem [shape: f32[2,3,256], index: 3, kind: input, shape index: {}]
  %s4 = inlined_call_operand.hbm [shape: f32[2,4,256], index: 4, kind: output, shape index: {}]
  %s5 = sld [smem:[#allocation0]]
  $region53: #{tpu_custom_call.1} parent=0
    _
  %s7 = ssub.s32 1, %s5
  %s8 = scalar_select 0, %s7, %s5
  $region1: #{tpu_custom_call.1} parent=0
    #allocation2 [shape = 'u8[512]{0}', space=smem, size = 0x200, scoped, tag = 'input window, operand 0, single buffered']
    #allocation3 [shape = 's32[2]{0}', space=sflag, size = 0x8, scoped, tag = 'scoped memory for tpu_custom_call.1']
    #allocation4 [shape = 's32[2]{0}', space=sflag, size = 0x8, scoped, tag = 'scoped memory for tpu_custom_call.1']
    #allocation5 [shape = 'u8[8192]{0}', space=vmem, size = 0x2000, scoped, tag = 'output window, operand 0']
    %9 = vsyncpa [#allocation4], 0
    %10 = vsyncpa [#allocation3], 0
    %s11 = scalar_lea.sflag [#allocation3], 1
    %12 = vsyncpa %s11, 0
    loop: start=0, step=1, limit=4
    $region2: #{tpu_custom_call.1} parent=1 // loop_pre_header
      _
    $region3: #{tpu_custom_call.1} parent=1 // loop_header
      %s14 = sphi 0, %s18
      %p15 = scmp.ge.s32.totalorder %s14, 4
      %s21 = sphi 0, %s33
      %s22 = sphi 0, %s29
      %s23 = sphi 0, %s21
      %s24 = sphi 0, %s22
      %s25 = sphi 0, %s23
      %s26 = sphi 0, %s24
      %s34 = sphi 0, %s34
      %s36 = sphi 0, %s34
      %s37 = sphi 0, %s36
      %s51 = sphi 0, %s37
      %s59 = sphi 0, %s61
      %s62 = sphi 0, %s59
      %s63 = sphi 0, %s62
      %s79 = sphi 0, %s63
      %s87 = sphi 0, %s89
      %s90 = sphi 0, %s87
      %s91 = sphi 0, %s90
      %s107 = sphi 0, %s91
      %s115 = sphi 0, %s117
      %s118 = sphi 0, %s115
      %s119 = sphi 0, %s118
      %s135 = sphi 0, %s119
      %s143 = sphi 0, %s145
      %s146 = sphi 0, %s143
      %s147 = sphi 0, %s146
      %s163 = sphi 0, %s147
    $region4: #{tpu_custom_call.1} parent=1 // loop_header_branch
      %17 = sbr.rel (%p15) target = $region8
    $region5: #{tpu_custom_call.1} parent=1 // loop_body
      %s19 = ssub.s32 %s14, 1
      %s20 = ssub.s32 %s14, 2
      %s27 = sadd.s32 1, %s22
      %p28 = scmp.ge.s32.totalorder %s27, 1
      %s29 = scalar_select %p28, 0, %s27
      %s30 = sadd.s32 1, %s21
      %s31 = scalar_select %p28, %s30, %s21
      %p32 = scmp.ge.s32.totalorder %s31, 2
      %s33 = scalar_select %p32, 0, %s31
      %s35 = sadd.s32 %s34, 1
      %p38 = scmp.eq.s32.totalorder %s14, 1
      %p39 = scmp.ne.s32.totalorder %s34, %s36
      %p40 = scmp.eq.s32.totalorder %s14, 0
      %p41 = por %p39, %p40
      %p42 = scmp.ne.s32.totalorder %s34, %s36
      %p43 = scmp.eq.s32.totalorder %s19, 1
      %p44 = por %p42, %p43
      %p45 = scmp.ne.s32.totalorder %s36, %s37
      %p46 = scmp.eq.s32.totalorder %s19, 0
      %p47 = por %p45, %p46
      %p48 = scmp.ne.s32.totalorder %s36, %s37
      %p49 = scmp.eq.s32.totalorder %s20, 1
      %p50 = por %p48, %p49
      %p52 = scmp.ne.s32.totalorder %s37, %s51
      %p53 = scmp.eq.s32.totalorder %s20, 0
      %p54 = por %p52, %p53
      %s55 = ssub.s32 %s21, %s33
      %s56 = ssub.s32 %s22, %s29
      %s57 = sor.u32 %s55, %s56
      %p58 = scmp.eq.s32.totalorder %s57, 0
      %s60 = sadd.s32 %s59, 1
      %s61 = scalar_select %p58, %s59, %s60
      %p64 = pneg %p58
      %p65 = scmp.eq.s32.totalorder %s14, 1
      %p66 = por %p64, %p65
      %p67 = scmp.ne.s32.totalorder %s59, %s62
      %p68 = scmp.eq.s32.totalorder %s14, 0
      %p69 = por %p67, %p68
      %p70 = scmp.ne.s32.totalorder %s59, %s62
      %p71 = scmp.eq.s32.totalorder %s19, 1
      %p72 = por %p70, %p71
      %p73 = scmp.ne.s32.totalorder %s62, %s63
      %p74 = scmp.eq.s32.totalorder %s19, 0
      %p75 = por %p73, %p74
      %p76 = scmp.ne.s32.totalorder %s62, %s63
      %p77 = scmp.eq.s32.totalorder %s20, 1
      %p78 = por %p76, %p77
      %p80 = scmp.ne.s32.totalorder %s63, %s79
      %p81 = scmp.eq.s32.totalorder %s20, 0
      %p82 = por %p80, %p81
      %s83 = ssub.s32 %s21, %s33
      %s84 = ssub.s32 %s22, %s29
      %s85 = sor.u32 %s83, %s84
      %p86 = scmp.eq.s32.totalorder %s85, 0
      %s88 = sadd.s32 %s87, 1
      %s89 = scalar_select %p86, %s87, %s88
      %p92 = pneg %p86
      %p93 = scmp.eq.s32.totalorder %s14, 1
      %p94 = por %p92, %p93
      %p95 = scmp.ne.s32.totalorder %s87, %s90
      %p96 = scmp.eq.s32.totalorder %s14, 0
      %p97 = por %p95, %p96
      %p98 = scmp.ne.s32.totalorder %s87, %s90
      %p99 = scmp.eq.s32.totalorder %s19, 1
      %p100 = por %p98, %p99
      %p101 = scmp.ne.s32.totalorder %s90, %s91
      %p102 = scmp.eq.s32.totalorder %s19, 0
      %p103 = por %p101, %p102
      %p104 = scmp.ne.s32.totalorder %s90, %s91
      %p105 = scmp.eq.s32.totalorder %s20, 1
      %p106 = por %p104, %p105
      %p108 = scmp.ne.s32.totalorder %s91, %s107
      %p109 = scmp.eq.s32.totalorder %s20, 0
      %p110 = por %p108, %p109
      %s111 = ssub.s32 %s21, %s33
      %s112 = ssub.s32 %s22, %s29
      %s113 = sor.u32 %s111, %s112
      %p114 = scmp.eq.s32.totalorder %s113, 0
      %s116 = sadd.s32 %s115, 1
      %s117 = scalar_select %p114, %s115, %s116
      %p120 = pneg %p114
      %p121 = scmp.eq.s32.totalorder %s14, 1
      %p122 = por %p120, %p121
      %p123 = scmp.ne.s32.totalorder %s115, %s118
      %p124 = scmp.eq.s32.totalorder %s14, 0
      %p125 = por %p123, %p124
      %p126 = scmp.ne.s32.totalorder %s115, %s118
      %p127 = scmp.eq.s32.totalorder %s19, 1
      %p128 = por %p126, %p127
      %p129 = scmp.ne.s32.totalorder %s118, %s119
      %p130 = scmp.eq.s32.totalorder %s19, 0
      %p131 = por %p129, %p130
      %p132 = scmp.ne.s32.totalorder %s118, %s119
      %p133 = scmp.eq.s32.totalorder %s20, 1
      %p134 = por %p132, %p133
      %p136 = scmp.ne.s32.totalorder %s119, %s135
      %p137 = scmp.eq.s32.totalorder %s20, 0
      %p138 = por %p136, %p137
      %s139 = ssub.s32 %s21, %s33
      %s140 = ssub.s32 %s22, %s29
      %s141 = sor.u32 %s139, %s140
      %p142 = scmp.eq.s32.totalorder %s141, 0
      %s144 = sadd.s32 %s143, 1
      %s145 = scalar_select %p142, %s143, %s144
      %p148 = pneg %p142
      %p149 = scmp.eq.s32.totalorder %s14, 1
      %p150 = por %p148, %p149
      %p151 = scmp.ne.s32.totalorder %s143, %s146
      %p152 = scmp.eq.s32.totalorder %s14, 0
      %p153 = por %p151, %p152
      %p154 = scmp.ne.s32.totalorder %s143, %s146
      %p155 = scmp.eq.s32.totalorder %s19, 1
      %p156 = por %p154, %p155
      %p157 = scmp.ne.s32.totalorder %s146, %s147
      %p158 = scmp.eq.s32.totalorder %s19, 0
      %p159 = por %p157, %p158
      %p160 = scmp.ne.s32.totalorder %s146, %s147
      %p161 = scmp.eq.s32.totalorder %s20, 1
      %p162 = por %p160, %p161
      %p164 = scmp.ne.s32.totalorder %s147, %s163
      %p165 = scmp.eq.s32.totalorder %s20, 0
      %p166 = por %p164, %p165
      %p167 = scmp.le.s32.totalorder 1, %s14
      %p168 = scmp.lt.s32.totalorder %s14, 3
      %p169 = pnand %p167, %p168
      %p170 = pneg %p169
      // Predicated region
      $region9: #{tpu_custom_call.1} parent=5 // pred_check
        _
      $region10: #{tpu_custom_call.1} parent=5 // pred_check_branch
        %172 = sbr.rel (%p169) target = $region12
      $region11: #{tpu_custom_call.1} parent=5 // pred_region
        %s173 = ssub.s32 %s14, 1
        // Predicated region
        $region13: #{tpu_custom_call.1} parent=11 // pred_check
          %p174 = pneg %p47
        $region14: #{tpu_custom_call.1} parent=11 // pred_check_branch
          %176 = sbr.rel (%p174) target = $region16
        $region15: #{tpu_custom_call.1} parent=11 // pred_region
          %s178 = ssub.s32 16, 16
          %179 = vsyncadd [#allocation4], %s178
          %s181 = sshll.u32 %s0, 4
          %s182 = int_to_ptr.vmem [resolvable:$true] %s181
          %184 = dma.vmem_to_smem %s182, 16, [#allocation2], [#allocation4]
        $region16: #{tpu_custom_call.1} parent=11 // pred_fallthru
          _
      $region12: #{tpu_custom_call.1} parent=5 // pred_fallthru
        _
      %p185 = scmp.lt.s32.totalorder %s14, 2
      // Predicated region
      $region17: #{tpu_custom_call.1} parent=5 // pred_check
        %p186 = pneg %p185
      $region18: #{tpu_custom_call.1} parent=5 // pred_check_branch
        %188 = sbr.rel (%p186) target = $region20
      $region19: #{tpu_custom_call.1} parent=5 // pred_region
        // Predicated region
        $region21: #{tpu_custom_call.1} parent=19 // pred_check
          %p189 = pneg %p69
        $region22: #{tpu_custom_call.1} parent=19 // pred_check_branch
          %191 = sbr.rel (%p189) target = $region24
        $region23: #{tpu_custom_call.1} parent=19 // pred_region
          %s192 = smul.u32 2, %s22
          %p193 = scmp.lt.s32.totalorder %s21, 1
          %s194 = scalar_select %p193, %s21, 1
          %p195 = scmp.lt.s32.totalorder %s192, 1
          %s196 = scalar_select %p195, %s192, 1
          %s197 = smul.addr %s194, 2
          %s198 = sadd.s32 %s196, %s197
          %s199 = smul.addr %s198, 4
          %s200 = scalar_lea.vmem %s1, %s199
          %s201 = smul.u32 2, %s22
        $region24: #{tpu_custom_call.1} parent=19 // pred_fallthru
          _
        // Predicated region
        $region25: #{tpu_custom_call.1} parent=19 // pred_check
          %p202 = pneg %p97
        $region26: #{tpu_custom_call.1} parent=19 // pred_check_branch
          %204 = sbr.rel (%p202) target = $region28
        $region27: #{tpu_custom_call.1} parent=19 // pred_region
          %s205 = smul.u32 2, %s22
          %p206 = scmp.lt.s32.totalorder %s21, 1
          %s207 = scalar_select %p206, %s21, 1
          %p208 = scmp.lt.s32.totalorder %s205, 1
          %s209 = scalar_select %p208, %s205, 1
          %s210 = smul.addr %s207, 2
          %s211 = sadd.s32 %s209, %s210
          %s212 = smul.addr %s211, 8
          %s213 = scalar_lea.vmem %s2, %s212
          %s214 = smul.u32 2, %s22
        $region28: #{tpu_custom_call.1} parent=19 // pred_fallthru
          _
        // Predicated region
        $region29: #{tpu_custom_call.1} parent=19 // pred_check
          %p215 = pneg %p125
        $region30: #{tpu_custom_call.1} parent=19 // pred_check_branch
          %217 = sbr.rel (%p215) target = $region32
        $region31: #{tpu_custom_call.1} parent=19 // pred_region
          %s218 = smul.u32 2, %s22
          %p219 = scmp.lt.s32.totalorder %s21, 1
          %s220 = scalar_select %p219, %s21, 1
          %p221 = scmp.lt.s32.totalorder %s218, 1
          %s222 = scalar_select %p221, %s218, 1
          %s223 = smul.addr %s220, 2
          %s224 = sadd.s32 %s222, %s223
          %s225 = smul.addr %s224, 4
          %s226 = scalar_lea.vmem %s3, %s225
          %s227 = smul.u32 2, %s22
        $region32: #{tpu_custom_call.1} parent=19 // pred_fallthru
          _
      $region20: #{tpu_custom_call.1} parent=5 // pred_fallthru
        _
      %p228 = scmp.le.s32.totalorder 1, %s14
      %p229 = scmp.lt.s32.totalorder %s14, 3
      %p230 = pnand %p228, %p229
      %p231 = pneg %p230
      // Predicated region
      $region33: #{tpu_custom_call.1} parent=5 // pred_check
        _
      $region34: #{tpu_custom_call.1} parent=5 // pred_check_branch
        %233 = sbr.rel (%p230) target = $region36
      $region35: #{tpu_custom_call.1} parent=5 // pred_region
        %s234 = ssub.s32 %s14, 1
        // Predicated region
        $region37: #{tpu_custom_call.1} parent=35 // pred_check
          %p235 = pneg %p47
        $region38: #{tpu_custom_call.1} parent=35 // pred_check_branch
          %237 = sbr.rel (%p235) target = $region40
        $region39: #{tpu_custom_call.1} parent=35 // pred_region
          %238 = dma.done [#allocation4], 16
        $region40: #{tpu_custom_call.1} parent=35 // pred_fallthru
          _
        %239 = sfence
        %p240 = pneg %p47
        %p241 = pneg %p44
        %s242 = smul.u32 2, %s24
        %p243 = scmp.lt.s32.totalorder %s23, 1
        %s244 = scalar_select %p243, %s23, 1
        %p245 = scmp.lt.s32.totalorder %s242, 1
        %s246 = scalar_select %p245, %s242, 1
        %s247 = smul.addr %s244, 2
        %s248 = sadd.s32 %s246, %s247
        %s249 = smul.addr %s248, 4
        %s250 = scalar_lea.vmem %s1, %s249
        %p251 = pneg %p75
        %p252 = pneg %p72
        %s253 = smul.u32 2, %s24
        %p254 = scmp.lt.s32.totalorder %s23, 1
        %s255 = scalar_select %p254, %s23, 1
        %p256 = scmp.lt.s32.totalorder %s253, 1
        %s257 = scalar_select %p256, %s253, 1
        %s258 = smul.addr %s255, 2
        %s259 = sadd.s32 %s257, %s258
        %s260 = smul.addr %s259, 8
        %s261 = scalar_lea.vmem %s2, %s260
        %p262 = pneg %p103
        %p263 = pneg %p100
        %s264 = smul.u32 2, %s24
        %p265 = scmp.lt.s32.totalorder %s23, 1
        %s266 = scalar_select %p265, %s23, 1
        %p267 = scmp.lt.s32.totalorder %s264, 1
        %s268 = scalar_select %p267, %s264, 1
        %s269 = smul.addr %s266, 2
        %s270 = sadd.s32 %s268, %s269
        %s271 = smul.addr %s270, 4
        %s272 = scalar_lea.vmem %s3, %s271
        %p273 = pneg %p131
        %p274 = pneg %p128
        %p275 = pneg %p159
        %p276 = pneg %p156
        %s277 = sand.u32 %s146, 1
        %s278 = scalar_lea.sflag [#allocation3], %s277
        %s279 = sand.u32 %s146, 1
        %s280 = smul.addr %s279, 8
        %s281 = scalar_lea.vmem [#allocation5], %s280
        %s282 = smul.u32 2, %s24
        %p283 = scmp.lt.s32.totalorder %s23, 1
        %s284 = scalar_select %p283, %s23, 1
        %p285 = scmp.lt.s32.totalorder %s282, 1
        %s286 = scalar_select %p285, %s282, 1
        %s287 = smul.addr %s284, 2
        %s288 = sadd.s32 %s286, %s287
        %s289 = smul.addr %s288, 4
        %s290 = scalar_lea.vmem %s1, %s289
        %s291 = smul.u32 2, %s24
        %s292 = smul.u32 2, %s24
        %p293 = scmp.lt.s32.totalorder %s23, 1
        %s294 = scalar_select %p293, %s23, 1
        %p295 = scmp.lt.s32.totalorder %s292, 1
        %s296 = scalar_select %p295, %s292, 1
        %s297 = smul.addr %s294, 2
        %s298 = sadd.s32 %s296, %s297
        %s299 = smul.addr %s298, 8
        %s300 = scalar_lea.vmem %s2, %s299
        %s301 = smul.u32 2, %s24
        %s302 = smul.u32 2, %s24
        %p303 = scmp.lt.s32.totalorder %s23, 1
        %s304 = scalar_select %p303, %s23, 1
        %p305 = scmp.lt.s32.totalorder %s302, 1
        %s306 = scalar_select %p305, %s302, 1
        %s307 = smul.addr %s304, 2
        %s308 = sadd.s32 %s306, %s307
        %s309 = smul.addr %s308, 4
        %s310 = scalar_lea.vmem %s3, %s309
        %s311 = smul.u32 2, %s24
        %s312 = smul.u32 2, %s24
        %v313 = vld [vmem:[%s290] sm:$0xff]
        %s314 = sld [smem:[#allocation2]]
        %v315 = vstv %s314
        %v316 = vmul.f32 %v313, %v315
        %s317 = sld [smem:[#allocation2 + $0x1]]
        %v318 = vld [vmem:[%s300] sm:$0xf]
        %v319 = vld [vmem:[%s300 + $0x8] sm:$0xf]
        %v320 = vstv %s317
        %v321 = vmul.f32 %v318, %v320
        %v322 = vmul.f32 %v319, %v320
        %v325 = vcombine.low %v321, %v322
        %v327 = vadd.f32 %v316, %v325
        %s328 = sld [smem:[#allocation2 + $0x2]]
        %v329 = vld [vmem:[%s310] sm:$0x77]
        %v330 = vstv %s328
        %v331 = vmul.f32 %v329, %v330
        %332 = vst [vmem:[%s281] sm:$0xff] %v327
        %v333 = vld [vmem:[%s281] sm:$0x77]
        %v334 = vadd.f32 %v333, %v331
        %335 = vst [vmem:[%s281] sm:$0x77] %v334
        %s336 = sand.u32 %s146, 1
        %s337 = scalar_lea.sflag [#allocation3], %s336
        %s338 = sand.u32 %s146, 1
        %s339 = smul.addr %s338, 8
        %s340 = scalar_lea.vmem [#allocation5], %s339
        // Predicated region
        $region41: #{tpu_custom_call.1} parent=35 // pred_check
          %p341 = pneg %p156
        $region42: #{tpu_custom_call.1} parent=35 // pred_check_branch
          %343 = sbr.rel (%p341) target = $region44
        $region43: #{tpu_custom_call.1} parent=35 // pred_region
          %s344 = smul.u32 2, %s24
          %s346 = ssub.s32 128, 128
          %347 = vsyncadd %s337, %s346
          %s348 = smul.addr %s23, 2
          %s349 = sadd.s32 %s344, %s348
          %s350 = smul.addr %s349, 64
          %s351 = scalar_lea.hbm %s4, %s350
          %s353 = sshll.u32 %s340, 4
          %s354 = int_to_ptr.vmem [resolvable:$true] %s353
          %356 = dma.vmem_to_hbm [thread:$0]  %s354, 128, %s351, %s337
        $region44: #{tpu_custom_call.1} parent=35 // pred_fallthru
          _
      $region36: #{tpu_custom_call.1} parent=5 // pred_fallthru
        _
      %p357 = scmp.le.s32.totalorder 2, %s14
      // Predicated region
      $region45: #{tpu_custom_call.1} parent=5 // pred_check
        %p358 = pneg %p357
      $region46: #{tpu_custom_call.1} parent=5 // pred_check_branch
        %360 = sbr.rel (%p358) target = $region48
      $region47: #{tpu_custom_call.1} parent=5 // pred_region
        %s361 = ssub.s32 %s14, 2
        // Predicated region
        $region49: #{tpu_custom_call.1} parent=47 // pred_check
          %p362 = pneg %p162
        $region50: #{tpu_custom_call.1} parent=47 // pred_check_branch
          %364 = sbr.rel (%p362) target = $region52
        $region51: #{tpu_custom_call.1} parent=47 // pred_region
          %s365 = sand.u32 %s147, 1
          %s366 = scalar_lea.sflag [#allocation3], %s365
          %s367 = sand.u32 %s147, 1
          %s368 = smul.addr %s367, 8
          %s369 = scalar_lea.vmem [#allocation5], %s368
          %370 = dma.done %s366, 128
        $region52: #{tpu_custom_call.1} parent=47 // pred_fallthru
          _
      $region48: #{tpu_custom_call.1} parent=5 // pred_fallthru
        _
    $region6: #{tpu_custom_call.1} parent=1 // loop_footer
      %s18 = sadd.s32 1, %s14
    $region7: #{tpu_custom_call.1} parent=1 // loop_footer_branch
      %13 = sbr.rel target = $region3
    $region8: #{tpu_custom_call.1} parent=1 // loop_exit
      _
    %371 = vsyncpa [#allocation3], 1
    %s372 = scalar_lea.sflag [#allocation3], 1
    %373 = vsyncpa %s372, 1
    %374 = vsyncpa [#allocation4], 1
    %s375 = scalar_lea.sflag [#allocation4], 1
    %376 = vsyncpa %s375, 1

</llo_original>
